<compile_context>
chip_gen: v7x
topology: tpu7x:2x2x1
jax: 0.10.0
libtpu: 0.0.40
codegen_flags: <defaults>
</compile_context>

<pallas_src>
import jax
import jax.numpy as jnp
from jax import lax
from jax.experimental import pallas as pl
from jax.experimental.pallas import tpu as pltpu


# ---------------------------------------------------------------------------
# Small JAX helpers for the pyramid branch (left to XLA).
# ---------------------------------------------------------------------------
def _conv2d(x, w, b, stride, padding):
    out = lax.conv_general_dilated(
        x.astype(jnp.float32),
        w.astype(jnp.float32),
        window_strides=(stride, stride),
        padding=[(padding, padding), (padding, padding)],
        dimension_numbers=("NCHW", "OIHW", "NCHW"),
        precision=lax.Precision.HIGHEST,
    )
    return out + b.reshape(1, -1, 1, 1).astype(jnp.float32)


def _conv_relu(x, w, b, stride=1, padding=0):
    # Conv2dNormRelu = Conv2d -> get_norm(norm_type) -> ReLU.
    # TODO(synk): get_norm('Unknown') is not defined in the spec; treated as identity
    # (equivalent to eval-mode BatchNorm with default running stats).
    return jnp.maximum(_conv2d(x, w, b, stride, padding), 0.0)


def _upsample_bilinear(x, out_h, out_w):
    """nn.Upsample(size=(out_h,out_w), mode='bilinear', align_corners=False)."""
    _, _, in_h, in_w = x.shape

    def src_coords(out_size, in_size):
        scale = in_size / out_size
        src = (jnp.arange(out_size, dtype=jnp.float32) + 0.5) * scale - 0.5
        src = jnp.maximum(src, 0.0)  # PyTorch clamps negative source coords to 0
        i0 = jnp.minimum(jnp.floor(src).astype(jnp.int32), in_size - 1)
        i1 = jnp.minimum(i0 + 1, in_size - 1)
        frac = src - i0.astype(jnp.float32)
        return i0, i1, frac

    y0, y1, fy = src_coords(out_h, in_h)
    x0, x1, fx = src_coords(out_w, in_w)

    top = x[:, :, y0, :]
    bot = x[:, :, y1, :]
    v = top * (1.0 - fy)[None, None, :, None] + bot * fy[None, None, :, None]
    left = v[:, :, :, x0]
    right = v[:, :, :, x1]
    return left * (1.0 - fx)[None, None, None, :] + right * fx[None, None, None, :]


def _pyramid_scale1(feat_map, p, H, W):
    """downsample1..3 + scale1..3 + upsample chain -> (B, 1, H, W) attention map."""
    # TODO(synk): tiny single-channel 7x7/5x5/3x3 pyramid + bilinear upsamples stay
    # in XLA, not Pallas (maps as small as 2x2; negligible HBM traffic).
    s1 = _conv_relu(feat_map, p["ds1_w"], p["ds1_b"], stride=2, padding=3)  # H/2
    s2 = _conv_relu(s1, p["ds2_w"], p["ds2_b"], stride=2, padding=2)        # H/4
    s3 = _conv_relu(s2, p["ds3_w"], p["ds3_b"], stride=2, padding=1)        # H/8
    s3 = _conv_relu(s3, p["sc3_w"], p["sc3_b"], stride=1, padding=1)
    s3 = _upsample_bilinear(s3, H // 4, W // 4)
    s2 = _conv_relu(s2, p["sc2_w"], p["sc2_b"], stride=1, padding=2) + s3
    s2 = _upsample_bilinear(s2, H // 2, W // 2)
    s1 = _conv_relu(s1, p["sc1_w"], p["sc1_b"], stride=1, padding=3) + s2
    return _upsample_bilinear(s1, H, W)                                      # (B,1,H,W)


# ---------------------------------------------------------------------------
# Fused Pallas kernel: mid 1x1-conv + ReLU, then scale1*mid + gap_gate combine.
# The gate (GAP branch result) is precomputed in a tiny XLA pre-pass and fed
# as a resident (C, 1) block — no N=1 MXU matmul inside the kernel.
# ---------------------------------------------------------------------------
def _fpa_fused_kernel(x_ref, s1_ref, gate_ref, wm_ref, bm_ref, o_ref):
    # mid branch: 1x1 conv == channel-mixing matmul on the MXU.
    # x tile stays in its native dtype (bf16 runs the MXU at native rate);
    # accumulation is f32 via preferred_element_type.
    mid = jnp.dot(wm_ref[...], x_ref[...], preferred_element_type=jnp.float32)
    mid = jnp.maximum(mid + bm_ref[...], 0.0)                 # (C, T_HW) f32

    # feat_map_out = scale1 * mid_branch + gap_branch
    s1 = s1_ref[...]                                          # (1, T_HW) f32
    gate = gate_ref[...]                                      # (C, 1)    f32
    o_ref[...] = (s1 * mid + gate).astype(o_ref.dtype)


def _round_up(x, m):
    return ((x + m - 1) // m) * m


def _choose_hw_tile(HW, C, x_bytes, out_bytes, max_tile=2048, budget=48 << 20):
    """Pick a lane-tile (multiple of 128) whose double-buffered slabs fit VMEM."""
    t = min(max_tile, _round_up(HW, 128))
    t = max(128, _round_up(t, 128))

    def need(tile):
        return (2 * C * tile * x_bytes          # x, double-buffered
                + 2 * tile * 4                   # scale1 (f32), double-buffered
                + 2 * C * tile * out_bytes       # out, double-buffered
                + C * C * x_bytes + 8 * C)       # resident weights / bias / gate

    while t > 128 and need(t) > budget:
        t -= 128
    return t, need(t)


def fpa_module_forward(feat_map, p, *, hw_tile=2048):
    """feat_map: (B, C, H, W) NCHW; p: dict of Conv2d weights (OIHW) and biases."""
    B, C, H, W = feat_map.shape
    HW = H * W
    x_dt = feat_map.dtype
    x_bytes = jnp.dtype(x_dt).itemsize

    # ---- pyramid branch (XLA; tiny single-channel maps) ----------------------
    scale1_up = _pyramid_scale1(feat_map, p, H, W)              # (B, 1, H, W) f32

    # ---- GAP + gate pre-pass (hoisted out of the per-tile kernel) ------------
    # AdaptiveAvgPool2d(1) -> 1x1 conv -> ReLU; bilinear upsample of a 1x1 map
    # with align_corners=False is a constant broadcast over (H, W).
    w_gap = p["gap_w"].reshape(C, C).astype(jnp.float32)
    b_gap = p["gap_b"].reshape(C).astype(jnp.float32)
    gap = jnp.mean(feat_map.astype(jnp.float32), axis=(2, 3))               # (B, C)
    gate = jnp.maximum(
        jnp.dot(gap, w_gap.T, precision=lax.Precision.HIGHEST) + b_gap, 0.0
    ).reshape(B, C, 1)                                                      # f32

    # ---- mid-branch weights: matmul runs in the activation dtype -------------
    w_mid = p["mid_w"].reshape(C, C).astype(x_dt)               # bf16 in -> bf16 W
    b_mid = p["mid_b"].reshape(C, 1).astype(jnp.float32)

    # ---- lane-pad HW to a multiple of 128 and tile it -------------------------
    t_hw, vmem_need = _choose_hw_tile(HW, C, x_bytes, x_bytes, max_tile=hw_tile)
    hw_pad = _round_up(HW, t_hw)
    n_t = hw_pad // t_hw

    x3 = feat_map.reshape(B, C, HW)                             # native dtype
    s1 = scale1_up.reshape(B, 1, HW).astype(jnp.float32)
    if hw_pad != HW:
        x3 = jnp.pad(x3, ((0, 0), (0, 0), (0, hw_pad - HW)))
        s1 = jnp.pad(s1, ((0, 0), (0, 0), (0, hw_pad - HW)))

    vmem_limit = int(min(64 << 20, max(2 * vmem_need + (1 << 20), 32 << 20)))

    cost = pl.CostEstimate(
        flops=2 * B * C * C * hw_pad,
        transcendentals=0,
        bytes_accessed=(B * C * hw_pad * 2 * x_bytes          # x in + out
                        + B * hw_pad * 4                       # scale1
                        + 2 * C * C * x_bytes),                # weights
    )

    out = pl.pallas_call(
        _fpa_fused_kernel,
        out_shape=jax.ShapeDtypeStruct((B, C, hw_pad), x_dt),
        grid_spec=pltpu.PrefetchScalarGridSpec(
            num_scalar_prefetch=0,
            grid=(B, n_t),
            in_specs=[
                pl.BlockSpec((None, C, t_hw), lambda b, t: (b, 0, t)),  # x tile
                pl.BlockSpec((None, 1, t_hw), lambda b, t: (b, 0, t)),  # scale1 tile
                pl.BlockSpec((None, C, 1), lambda b, t: (b, 0, 0)),     # gate (resident/batch)
                pl.BlockSpec((C, C), lambda b, t: (0, 0)),              # mid W (resident)
                pl.BlockSpec((C, 1), lambda b, t: (0, 0)),              # mid bias (resident)
            ],
            out_specs=pl.BlockSpec((None, C, t_hw), lambda b, t: (b, 0, t)),
        ),
        compiler_params=pltpu.CompilerParams(
            dimension_semantics=("parallel", "parallel"),   # megacore-friendly grid
            vmem_limit_bytes=vmem_limit,
        ),
        cost_estimate=cost,
    )(x3, s1, gate, w_mid, b_mid)

    if hw_pad != HW:
        out = out[:, :, :HW]
    return out.reshape(B, C, H, W)


# ---------------------------------------------------------------------------
# Pure-JAX reference of the full FPAModule forward (for self-checking).
# ---------------------------------------------------------------------------
def _reference(feat_map, p):
    B, C, H, W = feat_map.shape
    x = feat_map.astype(jnp.float32)

    gap = jnp.mean(x, axis=(2, 3), keepdims=True)                   # AdaptiveAvgPool2d(1)
    gap = _conv_relu(gap, p["gap_w"], p["gap_b"], stride=1, padding=0)
    gap = _upsample_bilinear(gap, H, W)

    mid = _conv_relu(x, p["mid_w"], p["mid_b"], stride=1, padding=0)

    scale1 = _pyramid_scale1(x, p, H, W)
    return (scale1 * mid + gap).astype(feat_map.dtype)


def _make_params(key, C):
    keys = jax.random.split(key, 8)

    def init_conv(k, out_ch, in_ch, ksize):
        kw, kb = jax.random.split(k)
        w = jax.random.normal(kw, (out_ch, in_ch, ksize, ksize), dtype=jnp.float32) * 0.1
        b = jax.random.normal(kb, (out_ch,), dtype=jnp.float32) * 0.1
        return w, b

    p = {}
    p["gap_w"], p["gap_b"] = init_conv(keys[0], C, C, 1)   # gap branch 1x1 conv
    p["mid_w"], p["mid_b"] = init_conv(keys[1], C, C, 1)   # mid branch 1x1 conv
    p["ds1_w"], p["ds1_b"] = init_conv(keys[2], 1, C, 7)   # downsample1 (stride 2)
    p["ds2_w"], p["ds2_b"] = init_conv(keys[3], 1, 1, 5)   # downsample2 (stride 2)
    p["ds3_w"], p["ds3_b"] = init_conv(keys[4], 1, 1, 3)   # downsample3 (stride 2)
    p["sc1_w"], p["sc1_b"] = init_conv(keys[5], 1, 1, 7)   # scale1
    p["sc2_w"], p["sc2_b"] = init_conv(keys[6], 1, 1, 5)   # scale2
    p["sc3_w"], p["sc3_b"] = init_conv(keys[7], 1, 1, 3)   # scale3
    return p


if __name__ == "__main__":
    key = jax.random.PRNGKey(0)
    k_p, k_x1, k_x2, k_x3 = jax.random.split(key, 4)

    B, C = 2, 4
    p = _make_params(k_p, C)

    # Case 1: f32, 16x16 (HW = 256, already a multiple of 128).
    x_f32 = jax.random.normal(k_x1, (B, C, 16, 16), dtype=jnp.float32)
    out1 = fpa_module_forward(x_f32, p)
    jax.block_until_ready(out1)
    ref1 = _reference(x_f32, p)
    assert out1.shape == x_f32.shape and out1.dtype == x_f32.dtype
    assert jnp.allclose(out1, ref1, atol=1e-3, rtol=1e-3), float(jnp.max(jnp.abs(out1 - ref1)))

    # Case 2: f32, 24x24 (HW = 576, NOT a multiple of 128 -> lane-pad path).
    x_pad = jax.random.normal(k_x2, (B, C, 24, 24), dtype=jnp.float32)
    out2 = fpa_module_forward(x_pad, p)
    jax.block_until_ready(out2)
    ref2 = _reference(x_pad, p)
    assert jnp.allclose(out2, ref2, atol=1e-3, rtol=1e-3), float(jnp.max(jnp.abs(out2 - ref2)))

    # Case 3: bf16 input (bf16 MXU path; looser tolerance for bf16 weights/output).
    x_bf16 = jax.random.normal(k_x3, (B, C, 16, 16), dtype=jnp.float32).astype(jnp.bfloat16)
    out3 = fpa_module_forward(x_bf16, p)
    jax.block_until_ready(out3)
    ref3 = _reference(x_bf16, p)
    assert out3.dtype == jnp.bfloat16
    assert jnp.allclose(out3.astype(jnp.float32), ref3.astype(jnp.float32),
                        atol=2e-2, rtol=2e-2), \
        float(jnp.max(jnp.abs(out3.astype(jnp.float32) - ref3.astype(jnp.float32))))

    print("KERNEL_OK")
</pallas_src>

<mosaic_0001>
module attributes {stable_mosaic.version = 11 : i64} {
  func.func @_fpa_fused_kernel(%arg0: i32, %arg1: i32, %arg2: memref<1x4x256xf32, #tpu.memory_space<vmem>>, %arg3: memref<1x1x256xf32, #tpu.memory_space<vmem>>, %arg4: memref<1x4x1xf32, #tpu.memory_space<vmem>>, %arg5: memref<4x4xf32, #tpu.memory_space<vmem>>, %arg6: memref<4x1xf32, #tpu.memory_space<vmem>>, %arg7: memref<1x4x256xf32, #tpu.memory_space<vmem>>) attributes {dimension_semantics = [#tpu.dimension_semantics<parallel>, #tpu.dimension_semantics<parallel>], iteration_bounds = array<i64: 2, 1>, scalar_prefetch = 0 : i64, scratch_operands = 0 : i64, tpu.core_type = #tpu.core_type<tc>, window_params = [{transform_indices = @transform_0, window_bounds = array<i64: 1, 4, 256>}, {transform_indices = @transform_1, window_bounds = array<i64: 1, 1, 256>}, {transform_indices = @transform_2, window_bounds = array<i64: 1, 4, 1>}, {pipeline_mode = #tpu.pipeline_mode<synchronous>, transform_indices = @transform_3, window_bounds = array<i64: 4, 4>}, {pipeline_mode = #tpu.pipeline_mode<synchronous>, transform_indices = @transform_4, window_bounds = array<i64: 4, 1>}, {transform_indices = @transform_5, window_bounds = array<i64: 1, 4, 256>}]} {
    %c0 = arith.constant 0 : index
    %c0_0 = arith.constant 0 : index
    %0 = vector.load %arg5[%c0, %c0_0] : memref<4x4xf32, #tpu.memory_space<vmem>>, vector<4x4xf32>
    %c0_1 = arith.constant 0 : index
    %c0_2 = arith.constant 0 : index
    %c0_3 = arith.constant 0 : index
    %1 = vector.load %arg2[%c0_1, %c0_2, %c0_3] : memref<1x4x256xf32, #tpu.memory_space<vmem>>, vector<1x4x256xf32>
    %2 = vector.shape_cast %1 : vector<1x4x256xf32> to vector<4x256xf32>
    %cst = arith.constant dense<0.000000e+00> : vector<4x256xf32>
    %3 = tpu.matmul %0, %2, %cst {dimension_numbers = #tpu.dot_dimension_numbers<[1], [0], [0], [1], [0, 0, 1, 1], [], []>} : vector<4x4xf32>, vector<4x256xf32>, vector<4x256xf32> -> vector<4x256xf32>
    %c0_4 = arith.constant 0 : index
    %c0_5 = arith.constant 0 : index
    %4 = vector.load %arg6[%c0_4, %c0_5] : memref<4x1xf32, #tpu.memory_space<vmem>>, vector<4x1xf32>
    %5 = vector.broadcast %4 : vector<4x1xf32> to vector<4x256xf32>
    %6 = arith.addf %3, %5 : vector<4x256xf32>
    %cst_6 = arith.constant 0.000000e+00 : f32
    %7 = vector.broadcast %cst_6 : f32 to vector<4x256xf32>
    %8 = arith.maximumf %6, %7 : vector<4x256xf32>
    %c0_7 = arith.constant 0 : index
    %c0_8 = arith.constant 0 : index
    %c0_9 = arith.constant 0 : index
    %9 = vector.load %arg3[%c0_7, %c0_8, %c0_9] : memref<1x1x256xf32, #tpu.memory_space<vmem>>, vector<1x1x256xf32>
    %10 = vector.shape_cast %9 : vector<1x1x256xf32> to vector<1x256xf32>
    %c0_10 = arith.constant 0 : index
    %c0_11 = arith.constant 0 : index
    %c0_12 = arith.constant 0 : index
    %11 = vector.load %arg4[%c0_10, %c0_11, %c0_12] : memref<1x4x1xf32, #tpu.memory_space<vmem>>, vector<1x4x1xf32>
    %12 = vector.shape_cast %11 : vector<1x4x1xf32> to vector<4x1xf32>
    %13 = vector.broadcast %10 : vector<1x256xf32> to vector<4x256xf32>
    %14 = arith.mulf %13, %8 : vector<4x256xf32>
    %15 = vector.broadcast %12 : vector<4x1xf32> to vector<4x256xf32>
    %16 = arith.addf %14, %15 : vector<4x256xf32>
    %c0_13 = arith.constant 0 : index
    %c0_14 = arith.constant 0 : index
    %c0_15 = arith.constant 0 : index
    %17 = vector.load %arg7[%c0_13, %c0_14, %c0_15] : memref<1x4x256xf32, #tpu.memory_space<vmem>>, vector<1x4x256xf32>
    %18 = vector.shape_cast %17 : vector<1x4x256xf32> to vector<4x256xf32>
    %19 = vector.shape_cast %16 : vector<4x256xf32> to vector<1x4x256xf32>
    tpu.vector_store %arg7[%c0_13, %c0_14, %c0_15], %19 {strides = array<i32>} : memref<1x4x256xf32, #tpu.memory_space<vmem>>, vector<1x4x256xf32>,
    return
  }
  func.func @transform_0(%arg0: i32, %arg1: i32) -> (i32, i32, i32) {
    %c0_i32 = arith.constant 0 : i32
    %c0_i32_0 = arith.constant 0 : i32
    return %arg0, %c0_i32, %arg1 : i32, i32, i32
  }
  func.func @transform_1(%arg0: i32, %arg1: i32) -> (i32, i32, i32) {
    %c0_i32 = arith.constant 0 : i32
    %c0_i32_0 = arith.constant 0 : i32
    return %arg0, %c0_i32, %arg1 : i32, i32, i32
  }
  func.func @transform_2(%arg0: i32, %arg1: i32) -> (i32, i32, i32) {
    %c0_i32 = arith.constant 0 : i32
    %c0_i32_0 = arith.constant 0 : i32
    %c0_i32_1 = arith.constant 0 : i32
    return %arg0, %c0_i32, %c0_i32_0 : i32, i32, i32
  }
  func.func @transform_3(%arg0: i32, %arg1: i32) -> (i32, i32) {
    %c0_i32 = arith.constant 0 : i32
    %c0_i32_0 = arith.constant 0 : i32
    %c0_i32_1 = arith.constant 0 : i32
    return %c0_i32, %c0_i32_0 : i32, i32
  }
  func.func @transform_4(%arg0: i32, %arg1: i32) -> (i32, i32) {
    %c0_i32 = arith.constant 0 : i32
    %c0_i32_0 = arith.constant 0 : i32
    %c0_i32_1 = arith.constant 0 : i32
    return %c0_i32, %c0_i32_0 : i32, i32
  }
  func.func @transform_5(%arg0: i32, %arg1: i32) -> (i32, i32, i32) {
    %c0_i32 = arith.constant 0 : i32
    %c0_i32_0 = arith.constant 0 : i32
    return %arg0, %c0_i32, %arg1 : i32, i32, i32
  }
}

</mosaic_0001>

<llo_original>
// kernel: tpu_custom_call.1
$region0: #{tpu_custom_call.1}
  #allocation0 [shape = 'u32[]', space=smem, size = 0x4, offset = 0x4, fixed_abs, tag = 'smem constant byte address 0x4 - core index']
  #allocation1 [shape = 'u32[144,128]{1,0:T(1,128)}', space=vmem, size = 0x12000, scoped, tag = 'internal scratch']
  %s0 = inlined_call_operand.hbm [shape: f32[2,4,256], index: 0, kind: input, shape index: {}]
  %s1 = inlined_call_operand.vmem [shape: f32[2,1,256], index: 1, kind: input, shape index: {}]
  %s2 = inlined_call_operand.vmem [shape: f32[2,4,1], index: 2, kind: input, shape index: {}]
  %s3 = inlined_call_operand.vmem [shape: f32[4,4], index: 3, kind: input, shape index: {}]
  %s4 = inlined_call_operand.vmem [shape: f32[4,1], index: 4, kind: input, shape index: {}]
  %s5 = inlined_call_operand.hbm [shape: f32[2,4,256], index: 5, kind: output, shape index: {}]
  %s6 = sld [smem:[#allocation0]]
  $region57: #{tpu_custom_call.1} parent=0
    _
  %s8 = ssub.s32 1, %s6
  %s9 = scalar_select 0, %s8, %s6
  $region1: #{tpu_custom_call.1} parent=0
    #allocation2 [shape = 'u8[8192]{0}', space=vmem, size = 0x2000, scoped, tag = 'input window, operand 0']
    #allocation3 [shape = 's32[2]{0}', space=sflag, size = 0x8, scoped, tag = 'scoped memory for tpu_custom_call.1']
    #allocation4 [shape = 's32[2]{0}', space=sflag, size = 0x8, scoped, tag = 'scoped memory for tpu_custom_call.1']
    #allocation5 [shape = 'u8[8192]{0}', space=vmem, size = 0x2000, scoped, tag = 'output window, operand 0']
    %10 = vsyncpa [#allocation3], 0
    %s11 = scalar_lea.sflag [#allocation3], 1
    %12 = vsyncpa %s11, 0
    %13 = vsyncpa [#allocation4], 0
    %s14 = scalar_lea.sflag [#allocation4], 1
    %15 = vsyncpa %s14, 0
    loop: start=0, step=1, limit=4
    $region2: #{tpu_custom_call.1} parent=1 // loop_pre_header
      _
    $region3: #{tpu_custom_call.1} parent=1 // loop_header
      %s17 = sphi 0, %s21
      %p18 = scmp.ge.s32.totalorder %s17, 4
      %s24 = sphi 0, %s36
      %s25 = sphi 0, %s32
      %s26 = sphi 0, %s24
      %s27 = sphi 0, %s25
      %s28 = sphi 0, %s26
      %s29 = sphi 0, %s27
      %s41 = sphi 0, %s43
      %s44 = sphi 0, %s41
      %s45 = sphi 0, %s44
      %s61 = sphi 0, %s45
      %s69 = sphi 0, %s71
      %s72 = sphi 0, %s69
      %s73 = sphi 0, %s72
      %s89 = sphi 0, %s73
      %s95 = sphi 0, %s97
      %s98 = sphi 0, %s95
      %s99 = sphi 0, %s98
      %s115 = sphi 0, %s99
      %s119 = sphi 0, %s119
      %s121 = sphi 0, %s119
      %s122 = sphi 0, %s121
      %s136 = sphi 0, %s122
      %s140 = sphi 0, %s140
      %s142 = sphi 0, %s140
      %s143 = sphi 0, %s142
      %s157 = sphi 0, %s143
      %s165 = sphi 0, %s167
      %s168 = sphi 0, %s165
      %s169 = sphi 0, %s168
      %s185 = sphi 0, %s169
    $region4: #{tpu_custom_call.1} parent=1 // loop_header_branch
      %20 = sbr.rel (%p18) target = $region8
    $region5: #{tpu_custom_call.1} parent=1 // loop_body
      %s22 = ssub.s32 %s17, 1
      %s23 = ssub.s32 %s17, 2
      %s30 = sadd.s32 1, %s25
      %p31 = scmp.ge.s32.totalorder %s30, 1
      %s32 = scalar_select %p31, 0, %s30
      %s33 = sadd.s32 1, %s24
      %s34 = scalar_select %p31, %s33, %s24
      %p35 = scmp.ge.s32.totalorder %s34, 2
      %s36 = scalar_select %p35, 0, %s34
      %s37 = ssub.s32 %s24, %s36
      %s38 = ssub.s32 %s25, %s32
      %s39 = sor.u32 %s37, %s38
      %p40 = scmp.eq.s32.totalorder %s39, 0
      %s42 = sadd.s32 %s41, 1
      %s43 = scalar_select %p40, %s41, %s42
      %p46 = pneg %p40
      %p47 = scmp.eq.s32.totalorder %s17, 1
      %p48 = por %p46, %p47
      %p49 = scmp.ne.s32.totalorder %s41, %s44
      %p50 = scmp.eq.s32.totalorder %s17, 0
      %p51 = por %p49, %p50
      %p52 = scmp.ne.s32.totalorder %s41, %s44
      %p53 = scmp.eq.s32.totalorder %s22, 1
      %p54 = por %p52, %p53
      %p55 = scmp.ne.s32.totalorder %s44, %s45
      %p56 = scmp.eq.s32.totalorder %s22, 0
      %p57 = por %p55, %p56
      %p58 = scmp.ne.s32.totalorder %s44, %s45
      %p59 = scmp.eq.s32.totalorder %s23, 1
      %p60 = por %p58, %p59
      %p62 = scmp.ne.s32.totalorder %s45, %s61
      %p63 = scmp.eq.s32.totalorder %s23, 0
      %p64 = por %p62, %p63
      %s65 = ssub.s32 %s24, %s36
      %s66 = ssub.s32 %s25, %s32
      %s67 = sor.u32 %s65, %s66
      %p68 = scmp.eq.s32.totalorder %s67, 0
      %s70 = sadd.s32 %s69, 1
      %s71 = scalar_select %p68, %s69, %s70
      %p74 = pneg %p68
      %p75 = scmp.eq.s32.totalorder %s17, 1
      %p76 = por %p74, %p75
      %p77 = scmp.ne.s32.totalorder %s69, %s72
      %p78 = scmp.eq.s32.totalorder %s17, 0
      %p79 = por %p77, %p78
      %p80 = scmp.ne.s32.totalorder %s69, %s72
      %p81 = scmp.eq.s32.totalorder %s22, 1
      %p82 = por %p80, %p81
      %p83 = scmp.ne.s32.totalorder %s72, %s73
      %p84 = scmp.eq.s32.totalorder %s22, 0
      %p85 = por %p83, %p84
      %p86 = scmp.ne.s32.totalorder %s72, %s73
      %p87 = scmp.eq.s32.totalorder %s23, 1
      %p88 = por %p86, %p87
      %p90 = scmp.ne.s32.totalorder %s73, %s89
      %p91 = scmp.eq.s32.totalorder %s23, 0
      %p92 = por %p90, %p91
      %s93 = ssub.s32 %s24, %s36
      %p94 = scmp.eq.s32.totalorder %s93, 0
      %s96 = sadd.s32 %s95, 1
      %s97 = scalar_select %p94, %s95, %s96
      %p100 = pneg %p94
      %p101 = scmp.eq.s32.totalorder %s17, 1
      %p102 = por %p100, %p101
      %p103 = scmp.ne.s32.totalorder %s95, %s98
      %p104 = scmp.eq.s32.totalorder %s17, 0
      %p105 = por %p103, %p104
      %p106 = scmp.ne.s32.totalorder %s95, %s98
      %p107 = scmp.eq.s32.totalorder %s22, 1
      %p108 = por %p106, %p107
      %p109 = scmp.ne.s32.totalorder %s98, %s99
      %p110 = scmp.eq.s32.totalorder %s22, 0
      %p111 = por %p109, %p110
      %p112 = scmp.ne.s32.totalorder %s98, %s99
      %p113 = scmp.eq.s32.totalorder %s23, 1
      %p114 = por %p112, %p113
      %p116 = scmp.ne.s32.totalorder %s99, %s115
      %p117 = scmp.eq.s32.totalorder %s23, 0
      %p118 = por %p116, %p117
      %s120 = sadd.s32 %s119, 1
      %p123 = scmp.eq.s32.totalorder %s17, 1
      %p124 = scmp.ne.s32.totalorder %s119, %s121
      %p125 = scmp.eq.s32.totalorder %s17, 0
      %p126 = por %p124, %p125
      %p127 = scmp.ne.s32.totalorder %s119, %s121
      %p128 = scmp.eq.s32.totalorder %s22, 1
      %p129 = por %p127, %p128
      %p130 = scmp.ne.s32.totalorder %s121, %s122
      %p131 = scmp.eq.s32.totalorder %s22, 0
      %p132 = por %p130, %p131
      %p133 = scmp.ne.s32.totalorder %s121, %s122
      %p134 = scmp.eq.s32.totalorder %s23, 1
      %p135 = por %p133, %p134
      %p137 = scmp.ne.s32.totalorder %s122, %s136
      %p138 = scmp.eq.s32.totalorder %s23, 0
      %p139 = por %p137, %p138
      %s141 = sadd.s32 %s140, 1
      %p144 = scmp.eq.s32.totalorder %s17, 1
      %p145 = scmp.ne.s32.totalorder %s140, %s142
      %p146 = scmp.eq.s32.totalorder %s17, 0
      %p147 = por %p145, %p146
      %p148 = scmp.ne.s32.totalorder %s140, %s142
      %p149 = scmp.eq.s32.totalorder %s22, 1
      %p150 = por %p148, %p149
      %p151 = scmp.ne.s32.totalorder %s142, %s143
      %p152 = scmp.eq.s32.totalorder %s22, 0
      %p153 = por %p151, %p152
      %p154 = scmp.ne.s32.totalorder %s142, %s143
      %p155 = scmp.eq.s32.totalorder %s23, 1
      %p156 = por %p154, %p155
      %p158 = scmp.ne.s32.totalorder %s143, %s157
      %p159 = scmp.eq.s32.totalorder %s23, 0
      %p160 = por %p158, %p159
      %s161 = ssub.s32 %s24, %s36
      %s162 = ssub.s32 %s25, %s32
      %s163 = sor.u32 %s161, %s162
      %p164 = scmp.eq.s32.totalorder %s163, 0
      %s166 = sadd.s32 %s165, 1
      %s167 = scalar_select %p164, %s165, %s166
      %p170 = pneg %p164
      %p171 = scmp.eq.s32.totalorder %s17, 1
      %p172 = por %p170, %p171
      %p173 = scmp.ne.s32.totalorder %s165, %s168
      %p174 = scmp.eq.s32.totalorder %s17, 0
      %p175 = por %p173, %p174
      %p176 = scmp.ne.s32.totalorder %s165, %s168
      %p177 = scmp.eq.s32.totalorder %s22, 1
      %p178 = por %p176, %p177
      %p179 = scmp.ne.s32.totalorder %s168, %s169
      %p180 = scmp.eq.s32.totalorder %s22, 0
      %p181 = por %p179, %p180
      %p182 = scmp.ne.s32.totalorder %s168, %s169
      %p183 = scmp.eq.s32.totalorder %s23, 1
      %p184 = por %p182, %p183
      %p186 = scmp.ne.s32.totalorder %s169, %s185
      %p187 = scmp.eq.s32.totalorder %s23, 0
      %p188 = por %p186, %p187
      %p189 = scmp.le.s32.totalorder 1, %s17
      %p190 = scmp.lt.s32.totalorder %s17, 3
      %p191 = pnand %p189, %p190
      %p192 = pneg %p191
      // Predicated region
      $region9: #{tpu_custom_call.1} parent=5 // pred_check
        _
      $region10: #{tpu_custom_call.1} parent=5 // pred_check_branch
        %194 = sbr.rel (%p191) target = $region12
      $region11: #{tpu_custom_call.1} parent=5 // pred_region
        %s195 = ssub.s32 %s17, 1
        // Predicated region
        $region13: #{tpu_custom_call.1} parent=11 // pred_check
          %p196 = pneg %p132
        $region14: #{tpu_custom_call.1} parent=11 // pred_check_branch
          %198 = sbr.rel (%p196) target = $region16
        $region15: #{tpu_custom_call.1} parent=11 // pred_region
          _
        $region16: #{tpu_custom_call.1} parent=11 // pred_fallthru
          _
        // Predicated region
        $region17: #{tpu_custom_call.1} parent=11 // pred_check
          %p199 = pneg %p153
        $region18: #{tpu_custom_call.1} parent=11 // pred_check_branch
          %201 = sbr.rel (%p199) target = $region20
        $region19: #{tpu_custom_call.1} parent=11 // pred_region
          _
        $region20: #{tpu_custom_call.1} parent=11 // pred_fallthru
          _
      $region12: #{tpu_custom_call.1} parent=5 // pred_fallthru
        _
      %p202 = scmp.lt.s32.totalorder %s17, 2
      // Predicated region
      $region21: #{tpu_custom_call.1} parent=5 // pred_check
        %p203 = pneg %p202
      $region22: #{tpu_custom_call.1} parent=5 // pred_check_branch
        %205 = sbr.rel (%p203) target = $region24
      $region23: #{tpu_custom_call.1} parent=5 // pred_region
        // Predicated region
        $region25: #{tpu_custom_call.1} parent=23 // pred_check
          %p206 = pneg %p51
        $region26: #{tpu_custom_call.1} parent=23 // pred_check_branch
          %208 = sbr.rel (%p206) target = $region28
        $region27: #{tpu_custom_call.1} parent=23 // pred_region
          %s209 = sand.u32 %s41, 1
          %s210 = scalar_lea.sflag [#allocation3], %s209
          %s211 = sand.u32 %s41, 1
          %s212 = smul.addr %s211, 8
          %s213 = scalar_lea.vmem [#allocation2], %s212
          %s214 = smul.u32 2, %s25
          %s216 = ssub.s32 128, 128
          %217 = vsyncadd %s210, %s216
          %s218 = smul.addr %s24, 2
          %s219 = sadd.s32 %s214, %s218
          %s220 = smul.addr %s219, 64
          %s221 = scalar_lea.hbm %s0, %s220
          %s223 = sshll.u32 %s213, 4
          %s224 = int_to_ptr.vmem [resolvable:$true] %s223
          %226 = dma.hbm_to_vmem [thread:$0]  %s221, 128, %s224, %s210
        $region28: #{tpu_custom_call.1} parent=23 // pred_fallthru
          _
        // Predicated region
        $region29: #{tpu_custom_call.1} parent=23 // pred_check
          %p227 = pneg %p79
        $region30: #{tpu_custom_call.1} parent=23 // pred_check_branch
          %229 = sbr.rel (%p227) target = $region32
        $region31: #{tpu_custom_call.1} parent=23 // pred_region
          %s230 = smul.u32 2, %s25
          %p231 = scmp.lt.s32.totalorder %s24, 1
          %s232 = scalar_select %p231, %s24, 1
          %p233 = scmp.lt.s32.totalorder %s230, 1
          %s234 = scalar_select %p233, %s230, 1
          %s235 = smul.addr %s232, 2
          %s236 = sadd.s32 %s234, %s235
          %s237 = scalar_lea.vmem %s1, %s236
          %s238 = smul.u32 2, %s25
        $region32: #{tpu_custom_call.1} parent=23 // pred_fallthru
          _
        // Predicated region
        $region33: #{tpu_custom_call.1} parent=23 // pred_check
          %p239 = pneg %p105
        $region34: #{tpu_custom_call.1} parent=23 // pred_check_branch
          %241 = sbr.rel (%p239) target = $region36
        $region35: #{tpu_custom_call.1} parent=23 // pred_region
          %p242 = scmp.lt.s32.totalorder %s24, 1
          %s243 = scalar_select %p242, %s24, 1
          %s244 = smul.addr %s243, 4
          %s245 = scalar_lea.vmem %s2, %s244
        $region36: #{tpu_custom_call.1} parent=23 // pred_fallthru
          _
      $region24: #{tpu_custom_call.1} parent=5 // pred_fallthru
        _
      %p246 = scmp.le.s32.totalorder 1, %s17
      %p247 = scmp.lt.s32.totalorder %s17, 3
      %p248 = pnand %p246, %p247
      %p249 = pneg %p248
      // Predicated region
      $region37: #{tpu_custom_call.1} parent=5 // pred_check
        _
      $region38: #{tpu_custom_call.1} parent=5 // pred_check_branch
        %251 = sbr.rel (%p248) target = $region40
      $region39: #{tpu_custom_call.1} parent=5 // pred_region
        %s252 = ssub.s32 %s17, 1
        %s253 = sand.u32 %s44, 1
        %s254 = scalar_lea.sflag [#allocation3], %s253
        %s255 = sand.u32 %s44, 1
        %s256 = smul.addr %s255, 8
        %s257 = scalar_lea.vmem [#allocation2], %s256
        // Predicated region
        $region41: #{tpu_custom_call.1} parent=39 // pred_check
          %p258 = pneg %p57
        $region42: #{tpu_custom_call.1} parent=39 // pred_check_branch
          %260 = sbr.rel (%p258) target = $region44
        $region43: #{tpu_custom_call.1} parent=39 // pred_region
          %261 = dma.done %s254, 128
        $region44: #{tpu_custom_call.1} parent=39 // pred_fallthru
          _
        %s262 = sand.u32 %s44, 1
        %s263 = scalar_lea.sflag [#allocation3], %s262
        %s264 = sand.u32 %s44, 1
        %s265 = smul.addr %s264, 8
        %s266 = scalar_lea.vmem [#allocation2], %s265
        %p267 = pneg %p57
        %p268 = pneg %p54
        %s269 = smul.u32 2, %s27
        %p270 = scmp.lt.s32.totalorder %s26, 1
        %s271 = scalar_select %p270, %s26, 1
        %p272 = scmp.lt.s32.totalorder %s269, 1
        %s273 = scalar_select %p272, %s269, 1
        %s274 = smul.addr %s271, 2
        %s275 = sadd.s32 %s273, %s274
        %s276 = scalar_lea.vmem %s1, %s275
        %p277 = pneg %p85
        %p278 = pneg %p82
        %p279 = scmp.lt.s32.totalorder %s26, 1
        %s280 = scalar_select %p279, %s26, 1
        %s281 = smul.addr %s280, 4
        %s282 = scalar_lea.vmem %s2, %s281
        %p283 = pneg %p111
        %p284 = pneg %p108
        %p285 = pneg %p132
        %p286 = pneg %p129
        %p287 = pneg %p153
        %p288 = pneg %p150
        %p289 = pneg %p181
        %p290 = pneg %p178
        %s291 = sand.u32 %s168, 1
        %s292 = scalar_lea.sflag [#allocation4], %s291
        %s293 = sand.u32 %s168, 1
        %s294 = smul.addr %s293, 8
        %s295 = scalar_lea.vmem [#allocation5], %s294
        %s296 = smul.u32 2, %s27
        %s297 = smul.u32 2, %s27
        %p298 = scmp.lt.s32.totalorder %s26, 1
        %s299 = scalar_select %p298, %s26, 1
        %p300 = scmp.lt.s32.totalorder %s297, 1
        %s301 = scalar_select %p300, %s297, 1
        %s302 = smul.addr %s299, 2
        %s303 = sadd.s32 %s301, %s302
        %s304 = scalar_lea.vmem %s1, %s303
        %s305 = smul.u32 2, %s27
        %p306 = scmp.lt.s32.totalorder %s26, 1
        %s307 = scalar_select %p306, %s26, 1
        %s308 = smul.addr %s307, 4
        %s309 = scalar_lea.vmem %s2, %s308
        %s310 = smul.u32 2, %s27
        %v311 = vld [vmem:[%s3] sm:$0xf]
        %v312 = vld [vmem:[%s257] sm:$0xff]
        %v313 = vld [vmem:[%s4] sm:$0xf]
        %315 = vset.pattern.permute.xlu0 0
        %316 = vperm.xlu0 %315, %v313
        %v317 = vpop.permute.xlu0 %316
        %v320 = vcombine.high %v312, %v312
        %vm321 = vcmask 31744
        %v323 = vsel %vm321, %v311, 0
        %vm325 = vcmask 1043456
        %v326 = vsel %vm325, %v312, 0
        %v328 = vsel %vm325, %v320, 0
        %330 = vmatprep.subr.mxu0 %v328
        %331 = vmatpush1.msra.mxu0 %v326
        %332 = vmatprep.subr.mxu0 0.0
        %333 = vmatpush1.msra.mxu0 0.0
        %334 = vmatprep.subr.mxu0 0.0
        %335 = vmatpush1.msra.mxu0 0.0
        %336 = vmatprep.subr.mxu0 0.0
        %337 = vmatpush1.msra.mxu0 0.0
        %338 = vmatprep.subr.mxu0 0.0
        %339 = vmatpush1.msra.mxu0 0.0
        %340 = vmatprep.subr.mxu0 0.0
        %341 = vmatpush1.msra.mxu0 0.0
        %342 = vmatprep.subr.mxu0 0.0
        %343 = vmatpush1.msra.mxu0 0.0
        %344 = vmatprep.subr.mxu0 0.0
        %345 = vmatpush1.msra.mxu0 0.0
        %346 = vmatprep.subr.mxu0 0.0
        %347 = vmatpush1.msra.mxu0 0.0
        %348 = vmatprep.subr.mxu0 0.0
        %349 = vmatpush1.msra.mxu0 0.0
        %350 = vmatprep.subr.mxu0 0.0
        %351 = vmatpush1.msra.mxu0 0.0
        %352 = vmatprep.subr.mxu0 0.0
        %353 = vmatpush1.msra.mxu0 0.0
        %354 = vmatprep.subr.mxu0 0.0
        %355 = vmatpush1.msra.mxu0 0.0
        %356 = vmatprep.subr.mxu0 0.0
        %357 = vmatpush1.msra.mxu0 0.0
        %358 = vmatprep.subr.mxu0 0.0
        %359 = vmatpush1.msra.mxu0 0.0
        %360 = vmatprep.subr.mxu0 0.0
        %361 = vmatpush1.msra.mxu0 0.0
        %362 = vmatprep.subr.mxu0 0.0
        %363 = vmatpush1.msra.mxu0 0.0
        %364 = vmatprep.subr.mxu0 0.0
        %365 = vmatpush1.msra.mxu0 0.0
        %366 = vmatprep.subr.mxu0 0.0
        %367 = vmatpush1.msra.mxu0 0.0
        %368 = vmatprep.subr.mxu0 0.0
        %369 = vmatpush1.msra.mxu0 0.0
        %370 = vmatprep.subr.mxu0 0.0
        %371 = vmatpush1.msra.mxu0 0.0
        %372 = vmatprep.subr.mxu0 0.0
        %373 = vmatpush1.msra.mxu0 0.0
        %374 = vmatprep.subr.mxu0 0.0
        %375 = vmatpush1.msra.mxu0 0.0
        %376 = vmatprep.subr.mxu0 0.0
        %377 = vmatpush1.msra.mxu0 0.0
        %378 = vmatprep.subr.mxu0 0.0
        %379 = vmatpush1.msra.mxu0 0.0
        %380 = vmatprep.subr.mxu0 0.0
        %381 = vmatpush1.msra.mxu0 0.0
        %382 = vmatprep.subr.mxu0 0.0
        %383 = vmatpush1.msra.mxu0 0.0
        %384 = vmatprep.subr.mxu0 0.0
        %385 = vmatpush1.msra.mxu0 0.0
        %386 = vmatprep.subr.mxu0 0.0
        %387 = vmatpush1.msra.mxu0 0.0
        %388 = vmatprep.subr.mxu0 0.0
        %389 = vmatpush1.msra.mxu0 0.0
        %390 = vmatprep.subr.mxu0 0.0
        %391 = vmatpush1.msra.mxu0 0.0
        %392 = vmatprep.subr.mxu0 0.0
        %393 = vmatpush1.msra.mxu0 0.0
        %394 = vmatprep.mubr.f32.mxu0 0.0
        %395 = vmatmul.mubr.f32.gmra.mrb[0].mxu0 %v323
        %v396 = vpop.f32.mrb[0].mxu0
        %v397 = vadd.f32 %v317, %v396
        %v398 = vpop.f32.mrb[0].mxu0
        %v399 = vadd.f32 %v317, %v398
        %400 = vdwg.mxu0
        %v401 = vmax.f32 %v397, 0.0
        %v402 = vmax.f32 %v399, 0.0
        %v403 = vld [vmem:[%s304] sm:$0x3]
        %v404 = vld [vmem:[%s309] sm:$0xf]
        %v406 = vlaneseq
        %v407 = vshrl.u32 %v406, 7
        %v408 = vsub.s32 0, %v407
        %v409 = vrot.slane %v403, %v408
        %v410 = vlaneseq
        %v411 = vshrl.u32 %v410, 7
        %v412 = vsub.s32 1, %v411
        %v413 = vrot.slane %v403, %v412
        %v416 = vmul.f32 %v409, %v401
        %v417 = vmul.f32 %v413, %v402
        %419 = vset.pattern.permute.xlu0 0
        %420 = vperm.xlu0 %419, %v404
        %v421 = vpop.permute.xlu0 %420
        %v423 = vadd.f32 %v416, %v421
        %v424 = vadd.f32 %v417, %v421
        %v427 = vcombine.low %v423, %v424
        %429 = vst [vmem:[%s295] sm:$0xff] %v427
        %s430 = sand.u32 %s168, 1
        %s431 = scalar_lea.sflag [#allocation4], %s430
        %s432 = sand.u32 %s168, 1
        %s433 = smul.addr %s432, 8
        %s434 = scalar_lea.vmem [#allocation5], %s433
        // Predicated region
        $region45: #{tpu_custom_call.1} parent=39 // pred_check
          %p435 = pneg %p178
        $region46: #{tpu_custom_call.1} parent=39 // pred_check_branch
          %437 = sbr.rel (%p435) target = $region48
        $region47: #{tpu_custom_call.1} parent=39 // pred_region
          %s438 = smul.u32 2, %s27
          %s440 = ssub.s32 128, 128
          %441 = vsyncadd %s431, %s440
          %s442 = smul.addr %s26, 2
          %s443 = sadd.s32 %s438, %s442
          %s444 = smul.addr %s443, 64
          %s445 = scalar_lea.hbm %s5, %s444
          %s447 = sshll.u32 %s434, 4
          %s448 = int_to_ptr.vmem [resolvable:$true] %s447
          %450 = dma.vmem_to_hbm [thread:$0]  %s448, 128, %s445, %s431
        $region48: #{tpu_custom_call.1} parent=39 // pred_fallthru
          _
      $region40: #{tpu_custom_call.1} parent=5 // pred_fallthru
        _
      %p451 = scmp.le.s32.totalorder 2, %s17
      // Predicated region
      $region49: #{tpu_custom_call.1} parent=5 // pred_check
        %p452 = pneg %p451
      $region50: #{tpu_custom_call.1} parent=5 // pred_check_branch
        %454 = sbr.rel (%p452) target = $region52
      $region51: #{tpu_custom_call.1} parent=5 // pred_region
        %s455 = ssub.s32 %s17, 2
        // Predicated region
        $region53: #{tpu_custom_call.1} parent=51 // pred_check
          %p456 = pneg %p184
        $region54: #{tpu_custom_call.1} parent=51 // pred_check_branch
          %458 = sbr.rel (%p456) target = $region56
        $region55: #{tpu_custom_call.1} parent=51 // pred_region
          %s459 = sand.u32 %s169, 1
          %s460 = scalar_lea.sflag [#allocation4], %s459
          %s461 = sand.u32 %s169, 1
          %s462 = smul.addr %s461, 8
          %s463 = scalar_lea.vmem [#allocation5], %s462
          %464 = dma.done %s460, 128
        $region56: #{tpu_custom_call.1} parent=51 // pred_fallthru
          _
      $region52: #{tpu_custom_call.1} parent=5 // pred_fallthru
        _
    $region6: #{tpu_custom_call.1} parent=1 // loop_footer
      %s21 = sadd.s32 1, %s17
    $region7: #{tpu_custom_call.1} parent=1 // loop_footer_branch
      %16 = sbr.rel target = $region3
    $region8: #{tpu_custom_call.1} parent=1 // loop_exit
      _
    %465 = vsyncpa [#allocation3], 1
    %s466 = scalar_lea.sflag [#allocation3], 1
    %467 = vsyncpa %s466, 1
    %468 = vsyncpa [#allocation4], 1
    %s469 = scalar_lea.sflag [#allocation4], 1
    %470 = vsyncpa %s469, 1

</llo_original>
